<compile_context>
chip_gen: v7x
topology: tpu7x:2x2x1
jax: 0.10.0
libtpu: 0.0.40
codegen_flags: <defaults>
</compile_context>

<pallas_src>
import functools

import jax
import jax.numpy as jnp
from jax.experimental import pallas as pl
from jax.experimental.pallas import tpu as pltpu


_LANE = 128
_SUBLANE = 8
_TK_MAX = 2048                       # reduction tile when D > _TK_MAX
_TM_MAX = 512                        # batch tile cap (mem-bound sweet spot)
_VMEM_BUDGET = 40 * 1024 * 1024      # conservative for v7x (64 MiB physical)
_VMEM_LIMIT = 48 * 1024 * 1024


def _round_up(x, m):
    return ((x + m - 1) // m) * m


def _dp_tk(D, tk_max=_TK_MAX):
    """Reduction layout (Dp, tk). tk == D (no x pad needed) whenever D <= tk_max."""
    if D <= tk_max:
        return D, D
    return _round_up(D, tk_max), tk_max


def _pick_tm(N, tm_max=_TM_MAX):
    """Batch tile: aim for >= 2 grid steps (v7x has 2 TCs), capped at tm_max."""
    half = -(-N // 2)
    return max(_SUBLANE, min(tm_max, _round_up(half, _SUBLANE)))


def _scatter_linear_kernel(x_ref, w_ref, b_ref, o_ref, *, tk, sliced_w):
    """out[i, :] = bias + sum_k x[i, k-tile] @ W[k-tile, :].

    The output block index is constant along the reduction axis (k), so
    o_ref is VMEM-resident and doubles as the f32 accumulator: it is
    initialized with the broadcast bias at k == 0 (no separate finalize).
    """
    k = pl.program_id(1)

    @pl.when(k == 0)
    def _():
        o_ref[...] = jnp.broadcast_to(
            b_ref[...].astype(jnp.float32), o_ref.shape)

    if sliced_w:
        # W is VMEM-resident: slice the current reduction slab out of it.
        # tk is a multiple of 128 on this path, so the slice stays tile-aligned.
        k_off = pl.multiple_of(k * tk, tk)
        w_blk = w_ref[pl.ds(k_off, tk), :]
    else:
        w_blk = w_ref[...]

    o_ref[...] += jnp.dot(
        x_ref[...], w_blk.astype(jnp.float32),
        preferred_element_type=jnp.float32)


def prepare_scatter_linear_params(weight, bias, *, tk_max=_TK_MAX,
                                  param_dtype=jnp.bfloat16):
    """One-time prep of the static head: transpose + zero-pad + bf16 cast.

    weight: (classes, D) PyTorch nn.Linear layout; bias: (classes,)
    Returns w_padded (Dp, Cp), b_padded (1, Cp), padded entries exactly zero,
    Cp a lane-dense multiple of 128.  bf16 storage halves the W HBM / VMEM
    traffic of this HBM-bound kernel; accumulation stays f32 in-kernel.
    """
    classes, D = weight.shape
    Dp, _ = _dp_tk(D, tk_max)
    Cp = _round_up(max(classes, _LANE), _LANE)
    w_padded = (jnp.zeros((Dp, Cp), param_dtype)
                .at[:D, :classes].set(weight.T.astype(param_dtype)))
    b_padded = (jnp.zeros((1, Cp), param_dtype)
                .at[:, :classes].set(bias.reshape(1, classes)
                                     .astype(param_dtype)))
    return w_padded, b_padded


def scatter_linear_forward(x, w_padded, b_padded, *, K, h, w, classes,
                           tk_max=_TK_MAX, tm_max=_TM_MAX):
    """
    x:        (N, K, h, w) float32 (NCHW, as in PyTorch)
    w_padded: (Dp, Cp)     pre-transposed, zero-padded weight (bf16 or f32)
    b_padded: (1, Cp)      zero-padded bias
    returns   (N, classes) float32
    """
    N = x.shape[0]
    D = K * h * w
    Dp, tk = _dp_tk(D, tk_max)
    Cp = w_padded.shape[1]
    assert w_padded.shape == (Dp, Cp)
    assert b_padded.shape == (1, Cp)

    # norm = Identity, clip = Identity (default ScatterLinear config).
    x_flat = x.reshape(N, D)
    if Dp != D:
        # Only when D > tk_max and D is not tk-aligned; zero rows of W make the
        # zero-padded x columns a no-op in the dot.
        x_flat = jnp.pad(x_flat, ((0, 0), (0, Dp - D)))

    tm = _pick_tm(N, tm_max)
    grid_k = Dp // tk

    # VMEM working set (bytes): double-buffered x tile, W, resident out, bias.
    x_itemsize = x_flat.dtype.itemsize
    w_itemsize = jnp.dtype(w_padded.dtype).itemsize
    x_bytes = 2 * tm * tk * x_itemsize
    o_bytes = 2 * tm * Cp * 4
    w_stream_bytes = 2 * tk * Cp * w_itemsize
    w_res_bytes = 2 * Dp * Cp * w_itemsize

    # Guard: shrink tm if a custom tm_max/tk_max blows the budget.
    while tm > _SUBLANE and x_bytes + o_bytes + w_stream_bytes > _VMEM_BUDGET:
        tm = max(_SUBLANE, _round_up(tm // 2, _SUBLANE))
        x_bytes = 2 * tm * tk * x_itemsize
        o_bytes = 2 * tm * Cp * 4

    # Keep W VMEM-resident (DMA'd from HBM exactly once) whenever it fits;
    # otherwise stream one (tk, Cp) slab per reduction step.
    w_resident = x_bytes + o_bytes + w_res_bytes <= _VMEM_BUDGET
    if w_resident:
        w_spec = pl.BlockSpec((Dp, Cp), lambda i, k: (0, 0))
    else:
        w_spec = pl.BlockSpec((tk, Cp), lambda i, k: (k, 0))
    sliced_w = w_resident and grid_k > 1

    grid = (pl.cdiv(N, tm), grid_k)   # ragged last batch block is fine: the
                                      # extra output rows are simply discarded.

    kernel = functools.partial(_scatter_linear_kernel, tk=tk, sliced_w=sliced_w)

    out = pl.pallas_call(
        kernel,
        out_shape=jax.ShapeDtypeStruct((N, Cp), jnp.float32),
        grid_spec=pltpu.PrefetchScalarGridSpec(
            num_scalar_prefetch=0,
            grid=grid,
            in_specs=[
                pl.BlockSpec((tm, tk), lambda i, k: (i, k)),    # x tile
                w_spec,                                         # weight
                pl.BlockSpec((1, Cp), lambda i, k: (0, 0)),     # bias (resident)
            ],
            out_specs=pl.BlockSpec((tm, Cp), lambda i, k: (i, 0)),
        ),
        compiler_params=pltpu.CompilerParams(
            dimension_semantics=("parallel", "arbitrary"),
            vmem_limit_bytes=_VMEM_LIMIT,
        ),
    )(x_flat, w_padded, b_padded)

    # Slice away the lane padding of the class dimension.
    return out[:, :classes]


if __name__ == "__main__":
    # Small shapes consistent with the module: batch=2, K=4, h=w=16, classes=10.
    N, K, h, w, classes = 2, 4, 16, 16, 10
    D = K * h * w

    key = jax.random.PRNGKey(0)
    kx, kw, kb = jax.random.split(key, 3)

    x = jax.random.normal(kx, (N, K, h, w), dtype=jnp.float32)
    # Deterministic nn.Linear-style init: U(-1/sqrt(D), 1/sqrt(D)).
    bound = 1.0 / (D ** 0.5)
    weight = jax.random.uniform(kw, (classes, D), jnp.float32, -bound, bound)
    bias = jax.random.uniform(kb, (classes,), jnp.float32, -bound, bound)

    # One-time prep of the static head (hoisted out of the per-call path).
    w_padded, b_padded = prepare_scatter_linear_params(weight, bias)

    out = scatter_linear_forward(
        x, w_padded, b_padded, K=K, h=h, w=w, classes=classes
    )
    out = jax.block_until_ready(out)

    # Pure-JAX reference using the same (bf16-stored) head parameters; the
    # kernel itself accumulates in f32, so tolerances stay tight.
    wT_q = w_padded[:D, :classes].astype(jnp.float32)      # (D, classes)
    b_q = b_padded[0, :classes].astype(jnp.float32)        # (classes,)
    ref = x.reshape(N, D) @ wT_q + b_q
    assert out.shape == (N, classes)
    assert jnp.allclose(out, ref, atol=1e-5, rtol=1e-5), float(
        jnp.max(jnp.abs(out - ref)))

    print("KERNEL_OK")
</pallas_src>

<mosaic_0001>
module attributes {stable_mosaic.version = 11 : i64} {
  func.func @_scatter_linear_kernel(%arg0: i32, %arg1: i32, %arg2: memref<8x1024xf32, #tpu.memory_space<vmem>>, %arg3: memref<1024x128xbf16, #tpu.memory_space<vmem>>, %arg4: memref<1x128xbf16, #tpu.memory_space<vmem>>, %arg5: memref<8x128xf32, #tpu.memory_space<vmem>>) attributes {dimension_semantics = [#tpu.dimension_semantics<parallel>, #tpu.dimension_semantics<arbitrary>], iteration_bounds = array<i64: 1, 1>, scalar_prefetch = 0 : i64, scratch_operands = 0 : i64, tpu.core_type = #tpu.core_type<tc>, window_params = [{transform_indices = @transform_0, window_bounds = array<i64: 8, 1024>}, {pipeline_mode = #tpu.pipeline_mode<synchronous>, transform_indices = @transform_1, window_bounds = array<i64: 1024, 128>}, {pipeline_mode = #tpu.pipeline_mode<synchronous>, transform_indices = @transform_2, window_bounds = array<i64: 1, 128>}, {transform_indices = @transform_3, window_bounds = array<i64: 8, 128>}]} {
    %c0_i32 = arith.constant 0 : i32
    %0 = arith.cmpi eq, %arg1, %c0_i32 : i32
    %1 = arith.extui %0 : i1 to i32
    %c0_i32_0 = arith.constant 0 : i32
    %2 = arith.cmpi ne, %1, %c0_i32_0 : i32
    scf.if %2 {
      %c0_8 = arith.constant 0 : index
      %c0_9 = arith.constant 0 : index
      %10 = vector.load %arg4[%c0_8, %c0_9] : memref<1x128xbf16, #tpu.memory_space<vmem>>, vector<1x128xbf16>
      %11 = arith.extf %10 : vector<1x128xbf16> to vector<1x128xf32>
      %12 = vector.shape_cast %11 : vector<1x128xf32> to vector<1x128xf32>
      %13 = vector.broadcast %12 : vector<1x128xf32> to vector<8x128xf32>
      %c0_10 = arith.constant 0 : index
      %c0_11 = arith.constant 0 : index
      %14 = vector.load %arg5[%c0_10, %c0_11] : memref<8x128xf32, #tpu.memory_space<vmem>>, vector<8x128xf32>
      tpu.vector_store %arg5[%c0_10, %c0_11], %13 {strides = array<i32>} : memref<8x128xf32, #tpu.memory_space<vmem>>, vector<8x128xf32>,
    } else {
    }
    %c0 = arith.constant 0 : index
    %c0_1 = arith.constant 0 : index
    %3 = vector.load %arg3[%c0, %c0_1] : memref<1024x128xbf16, #tpu.memory_space<vmem>>, vector<1024x128xbf16>
    %c0_2 = arith.constant 0 : index
    %c0_3 = arith.constant 0 : index
    %4 = vector.load %arg5[%c0_2, %c0_3] : memref<8x128xf32, #tpu.memory_space<vmem>>, vector<8x128xf32>
    %c0_4 = arith.constant 0 : index
    %c0_5 = arith.constant 0 : index
    %5 = vector.load %arg2[%c0_4, %c0_5] : memref<8x1024xf32, #tpu.memory_space<vmem>>, vector<8x1024xf32>
    %6 = arith.extf %3 : vector<1024x128xbf16> to vector<1024x128xf32>
    %cst = arith.constant dense<0.000000e+00> : vector<8x128xf32>
    %7 = tpu.matmul %5, %6, %cst {dimension_numbers = #tpu.dot_dimension_numbers<[1], [0], [0], [1], [0, 0, 1, 1], [], []>} : vector<8x1024xf32>, vector<1024x128xf32>, vector<8x128xf32> -> vector<8x128xf32>
    %8 = arith.addf %4, %7 : vector<8x128xf32>
    %c0_6 = arith.constant 0 : index
    %c0_7 = arith.constant 0 : index
    %9 = vector.load %arg5[%c0_6, %c0_7] : memref<8x128xf32, #tpu.memory_space<vmem>>, vector<8x128xf32>
    tpu.vector_store %arg5[%c0_6, %c0_7], %8 {strides = array<i32>} : memref<8x128xf32, #tpu.memory_space<vmem>>, vector<8x128xf32>,
    return
  }
  func.func @transform_0(%arg0: i32, %arg1: i32) -> (i32, i32) {
    %c0_i32 = arith.constant 0 : i32
    return %arg0, %arg1 : i32, i32
  }
  func.func @transform_1(%arg0: i32, %arg1: i32) -> (i32, i32) {
    %c0_i32 = arith.constant 0 : i32
    %c0_i32_0 = arith.constant 0 : i32
    %c0_i32_1 = arith.constant 0 : i32
    return %c0_i32, %c0_i32_0 : i32, i32
  }
  func.func @transform_2(%arg0: i32, %arg1: i32) -> (i32, i32) {
    %c0_i32 = arith.constant 0 : i32
    %c0_i32_0 = arith.constant 0 : i32
    %c0_i32_1 = arith.constant 0 : i32
    return %c0_i32, %c0_i32_0 : i32, i32
  }
  func.func @transform_3(%arg0: i32, %arg1: i32) -> (i32, i32) {
    %c0_i32 = arith.constant 0 : i32
    %c0_i32_0 = arith.constant 0 : i32
    return %arg0, %c0_i32 : i32, i32
  }
}

</mosaic_0001>

<llo_original>
// kernel: tpu_custom_call.1
$region0: #{tpu_custom_call.1}
  #allocation0 [shape = 'u32[]', space=smem, size = 0x4, offset = 0x4, fixed_abs, tag = 'smem constant byte address 0x4 - core index']
  #allocation1 [shape = 'u32[144,128]{1,0:T(1,128)}', space=vmem, size = 0x12000, scoped, tag = 'internal scratch']
  %s0 = inlined_call_operand.hbm [shape: f32[2,1024], index: 0, kind: input, shape index: {}]
  %s1 = inlined_call_operand.hbm [shape: bf16[1024,128], index: 1, kind: input, shape index: {}]
  %s2 = inlined_call_operand.vmem [shape: bf16[1,128], index: 2, kind: input, shape index: {}]
  %s3 = inlined_call_operand.hbm [shape: f32[2,128], index: 3, kind: output, shape index: {}]
  %s4 = sld [smem:[#allocation0]]
  $region34: #{tpu_custom_call.1} parent=0
    _
  %s6 = ssub.s32 1, %s4
  %s7 = scalar_select 0, %s6, %s4
  $region1: #{tpu_custom_call.1} parent=0
    #allocation2 [shape = 'u8[32768]{0}', space=vmem, size = 0x8000, scoped, tag = 'input window, operand 0, single buffered']
    #allocation3 [shape = 's32[1]{0}', space=sflag, size = 0x4, scoped, tag = 'scoped memory for tpu_custom_call.1']
    #allocation4 [shape = 's32[1]{0}', space=sflag, size = 0x4, scoped, tag = 'scoped memory for tpu_custom_call.1']
    #allocation5 [shape = 'u8[262144]{0}', space=vmem, size = 0x40000, scoped, tag = 'input window, operand 1, single buffered']
    #allocation6 [shape = 's32[1]{0}', space=sflag, size = 0x4, scoped, tag = 'scoped memory for tpu_custom_call.1']
    #allocation7 [shape = 'u8[4096]{0}', space=vmem, size = 0x1000, scoped, tag = 'output window, operand 0, single buffered']
    %8 = vsyncpa [#allocation3], 0
    %9 = vsyncpa [#allocation6], 0
    %10 = vsyncpa [#allocation4], 0
    // Predicated region
    $region2: #{tpu_custom_call.1} parent=1 // pred_check
      _
    $region3: #{tpu_custom_call.1} parent=1 // pred_check_branch
      %12 = sbr.rel (0) target = $region5
    $region4: #{tpu_custom_call.1} parent=1 // pred_region
      %s14 = ssub.s32 1024, 256
      %15 = vsyncadd [#allocation3], %s14
      %s16 = sshll.u32 [#allocation2], 4
      %s17 = int_to_ptr.vmem [resolvable:$true] %s16
      %22 = dma.hbm_to_vmem [thread:$0]  %s0, 256, %s17, [#allocation3], 256, 256, 16
    $region5: #{tpu_custom_call.1} parent=1 // pred_fallthru
      _
    // Predicated region
    $region6: #{tpu_custom_call.1} parent=1 // pred_check
      _
    $region7: #{tpu_custom_call.1} parent=1 // pred_check_branch
      %24 = sbr.rel (0) target = $region9
    $region8: #{tpu_custom_call.1} parent=1 // pred_region
      %s26 = ssub.s32 8192, 8192
      %27 = vsyncadd [#allocation6], %s26
      %s28 = sshll.u32 [#allocation5], 4
      %s29 = int_to_ptr.vmem [resolvable:$true] %s28
      %34 = dma.hbm_to_vmem [thread:$0]  %s1, 8192, %s29, [#allocation6], 64, 64, 4
    $region9: #{tpu_custom_call.1} parent=1 // pred_fallthru
      _
    // Predicated region
    $region10: #{tpu_custom_call.1} parent=1 // pred_check
      _
    $region11: #{tpu_custom_call.1} parent=1 // pred_check_branch
      %36 = sbr.rel (0) target = $region13
    $region12: #{tpu_custom_call.1} parent=1 // pred_region
      _
    $region13: #{tpu_custom_call.1} parent=1 // pred_fallthru
      _
    // Predicated region
    $region14: #{tpu_custom_call.1} parent=1 // pred_check
      _
    $region15: #{tpu_custom_call.1} parent=1 // pred_check_branch
      %38 = sbr.rel (0) target = $region17
    $region16: #{tpu_custom_call.1} parent=1 // pred_region
      %39 = dma.done [#allocation3], 1024
    $region17: #{tpu_custom_call.1} parent=1 // pred_fallthru
      _
    // Predicated region
    $region18: #{tpu_custom_call.1} parent=1 // pred_check
      _
    $region19: #{tpu_custom_call.1} parent=1 // pred_check_branch
      %41 = sbr.rel (0) target = $region21
    $region20: #{tpu_custom_call.1} parent=1 // pred_region
      %42 = dma.done [#allocation6], 8192
    $region21: #{tpu_custom_call.1} parent=1 // pred_fallthru
      _
    %p43 = scmp.eq.s32.totalorder 0, 0
    // Predicated region
    $region22: #{tpu_custom_call.1} parent=1 // pred_check
      %p44 = pneg %p43
    $region23: #{tpu_custom_call.1} parent=1 // pred_check_branch
      %46 = sbr.rel (%p44) target = $region25
    $region24: #{tpu_custom_call.1} parent=1 // pred_region
      %v47 = vld [vmem:[%s2] sm:$0x1]
      %v48 = vunpack.c.l.bf16 %v47
      %v49 = vlaneseq
      %v50 = vshrl.u32 %v49, 7
      %v51 = vsub.s32 0, %v50
      %v52 = vrot.slane %v48, %v51
      %53 = vst [vmem:[#allocation7] sm:$0xff] %v52
    $region25: #{tpu_custom_call.1} parent=1 // pred_fallthru
      _
    %v54 = vld [vmem:[#allocation5] sm:$0xf]
    %v55 = vld [vmem:[#allocation5 + $0x4] sm:$0xf]
    %v56 = vld [vmem:[#allocation5 + $0x8] sm:$0xf]
    %v57 = vld [vmem:[#allocation5 + $0xc] sm:$0xf]
    %v58 = vld [vmem:[#allocation5 + $0x10] sm:$0xf]
    %v59 = vld [vmem:[#allocation5 + $0x14] sm:$0xf]
    %v60 = vld [vmem:[#allocation5 + $0x18] sm:$0xf]
    %v61 = vld [vmem:[#allocation5 + $0x1c] sm:$0xf]
    %v62 = vld [vmem:[#allocation5 + $0x20] sm:$0xf]
    %v63 = vld [vmem:[#allocation5 + $0x24] sm:$0xf]
    %v64 = vld [vmem:[#allocation5 + $0x28] sm:$0xf]
    %v65 = vld [vmem:[#allocation5 + $0x2c] sm:$0xf]
    %v66 = vld [vmem:[#allocation5 + $0x30] sm:$0xf]
    %v67 = vld [vmem:[#allocation5 + $0x34] sm:$0xf]
    %v68 = vld [vmem:[#allocation5 + $0x38] sm:$0xf]
    %v69 = vld [vmem:[#allocation5 + $0x3c] sm:$0xf]
    %v70 = vld [vmem:[#allocation5 + $0x40] sm:$0xf]
    %v71 = vld [vmem:[#allocation5 + $0x44] sm:$0xf]
    %v72 = vld [vmem:[#allocation5 + $0x48] sm:$0xf]
    %v73 = vld [vmem:[#allocation5 + $0x4c] sm:$0xf]
    %v74 = vld [vmem:[#allocation5 + $0x50] sm:$0xf]
    %v75 = vld [vmem:[#allocation5 + $0x54] sm:$0xf]
    %v76 = vld [vmem:[#allocation5 + $0x58] sm:$0xf]
    %v77 = vld [vmem:[#allocation5 + $0x5c] sm:$0xf]
    %v78 = vld [vmem:[#allocation5 + $0x60] sm:$0xf]
    %v79 = vld [vmem:[#allocation5 + $0x64] sm:$0xf]
    %v80 = vld [vmem:[#allocation5 + $0x68] sm:$0xf]
    %v81 = vld [vmem:[#allocation5 + $0x6c] sm:$0xf]
    %v82 = vld [vmem:[#allocation5 + $0x70] sm:$0xf]
    %v83 = vld [vmem:[#allocation5 + $0x74] sm:$0xf]
    %v84 = vld [vmem:[#allocation5 + $0x78] sm:$0xf]
    %v85 = vld [vmem:[#allocation5 + $0x7c] sm:$0xf]
    %v86 = vld [vmem:[#allocation5 + $0x80] sm:$0xf]
    %v87 = vld [vmem:[#allocation5 + $0x84] sm:$0xf]
    %v88 = vld [vmem:[#allocation5 + $0x88] sm:$0xf]
    %v89 = vld [vmem:[#allocation5 + $0x8c] sm:$0xf]
    %v90 = vld [vmem:[#allocation5 + $0x90] sm:$0xf]
    %v91 = vld [vmem:[#allocation5 + $0x94] sm:$0xf]
    %v92 = vld [vmem:[#allocation5 + $0x98] sm:$0xf]
    %v93 = vld [vmem:[#allocation5 + $0x9c] sm:$0xf]
    %v94 = vld [vmem:[#allocation5 + $0xa0] sm:$0xf]
    %v95 = vld [vmem:[#allocation5 + $0xa4] sm:$0xf]
    %v96 = vld [vmem:[#allocation5 + $0xa8] sm:$0xf]
    %v97 = vld [vmem:[#allocation5 + $0xac] sm:$0xf]
    %v98 = vld [vmem:[#allocation5 + $0xb0] sm:$0xf]
    %v99 = vld [vmem:[#allocation5 + $0xb4] sm:$0xf]
    %v100 = vld [vmem:[#allocation5 + $0xb8] sm:$0xf]
    %v101 = vld [vmem:[#allocation5 + $0xbc] sm:$0xf]
    %v102 = vld [vmem:[#allocation5 + $0xc0] sm:$0xf]
    %v103 = vld [vmem:[#allocation5 + $0xc4] sm:$0xf]
    %v104 = vld [vmem:[#allocation5 + $0xc8] sm:$0xf]
    %v105 = vld [vmem:[#allocation5 + $0xcc] sm:$0xf]
    %v106 = vld [vmem:[#allocation5 + $0xd0] sm:$0xf]
    %v107 = vld [vmem:[#allocation5 + $0xd4] sm:$0xf]
    %v108 = vld [vmem:[#allocation5 + $0xd8] sm:$0xf]
    %v109 = vld [vmem:[#allocation5 + $0xdc] sm:$0xf]
    %v110 = vld [vmem:[#allocation5 + $0xe0] sm:$0xf]
    %v111 = vld [vmem:[#allocation5 + $0xe4] sm:$0xf]
    %v112 = vld [vmem:[#allocation5 + $0xe8] sm:$0xf]
    %v113 = vld [vmem:[#allocation5 + $0xec] sm:$0xf]
    %v114 = vld [vmem:[#allocation5 + $0xf0] sm:$0xf]
    %v115 = vld [vmem:[#allocation5 + $0xf4] sm:$0xf]
    %v116 = vld [vmem:[#allocation5 + $0xf8] sm:$0xf]
    %v117 = vld [vmem:[#allocation5 + $0xfc] sm:$0xf]
    %v118 = vld [vmem:[#allocation5 + $0x100] sm:$0xf]
    %v119 = vld [vmem:[#allocation5 + $0x104] sm:$0xf]
    %v120 = vld [vmem:[#allocation5 + $0x108] sm:$0xf]
    %v121 = vld [vmem:[#allocation5 + $0x10c] sm:$0xf]
    %v122 = vld [vmem:[#allocation5 + $0x110] sm:$0xf]
    %v123 = vld [vmem:[#allocation5 + $0x114] sm:$0xf]
    %v124 = vld [vmem:[#allocation5 + $0x118] sm:$0xf]
    %v125 = vld [vmem:[#allocation5 + $0x11c] sm:$0xf]
    %v126 = vld [vmem:[#allocation5 + $0x120] sm:$0xf]
    %v127 = vld [vmem:[#allocation5 + $0x124] sm:$0xf]
    %v128 = vld [vmem:[#allocation5 + $0x128] sm:$0xf]
    %v129 = vld [vmem:[#allocation5 + $0x12c] sm:$0xf]
    %v130 = vld [vmem:[#allocation5 + $0x130] sm:$0xf]
    %v131 = vld [vmem:[#allocation5 + $0x134] sm:$0xf]
    %v132 = vld [vmem:[#allocation5 + $0x138] sm:$0xf]
    %v133 = vld [vmem:[#allocation5 + $0x13c] sm:$0xf]
    %v134 = vld [vmem:[#allocation5 + $0x140] sm:$0xf]
    %v135 = vld [vmem:[#allocation5 + $0x144] sm:$0xf]
    %v136 = vld [vmem:[#allocation5 + $0x148] sm:$0xf]
    %v137 = vld [vmem:[#allocation5 + $0x14c] sm:$0xf]
    %v138 = vld [vmem:[#allocation5 + $0x150] sm:$0xf]
    %v139 = vld [vmem:[#allocation5 + $0x154] sm:$0xf]
    %v140 = vld [vmem:[#allocation5 + $0x158] sm:$0xf]
    %v141 = vld [vmem:[#allocation5 + $0x15c] sm:$0xf]
    %v142 = vld [vmem:[#allocation5 + $0x160] sm:$0xf]
    %v143 = vld [vmem:[#allocation5 + $0x164] sm:$0xf]
    %v144 = vld [vmem:[#allocation5 + $0x168] sm:$0xf]
    %v145 = vld [vmem:[#allocation5 + $0x16c] sm:$0xf]
    %v146 = vld [vmem:[#allocation5 + $0x170] sm:$0xf]
    %v147 = vld [vmem:[#allocation5 + $0x174] sm:$0xf]
    %v148 = vld [vmem:[#allocation5 + $0x178] sm:$0xf]
    %v149 = vld [vmem:[#allocation5 + $0x17c] sm:$0xf]
    %v150 = vld [vmem:[#allocation5 + $0x180] sm:$0xf]
    %v151 = vld [vmem:[#allocation5 + $0x184] sm:$0xf]
    %v152 = vld [vmem:[#allocation5 + $0x188] sm:$0xf]
    %v153 = vld [vmem:[#allocation5 + $0x18c] sm:$0xf]
    %v154 = vld [vmem:[#allocation5 + $0x190] sm:$0xf]
    %v155 = vld [vmem:[#allocation5 + $0x194] sm:$0xf]
    %v156 = vld [vmem:[#allocation5 + $0x198] sm:$0xf]
    %v157 = vld [vmem:[#allocation5 + $0x19c] sm:$0xf]
    %v158 = vld [vmem:[#allocation5 + $0x1a0] sm:$0xf]
    %v159 = vld [vmem:[#allocation5 + $0x1a4] sm:$0xf]
    %v160 = vld [vmem:[#allocation5 + $0x1a8] sm:$0xf]
    %v161 = vld [vmem:[#allocation5 + $0x1ac] sm:$0xf]
    %v162 = vld [vmem:[#allocation5 + $0x1b0] sm:$0xf]
    %v163 = vld [vmem:[#allocation5 + $0x1b4] sm:$0xf]
    %v164 = vld [vmem:[#allocation5 + $0x1b8] sm:$0xf]
    %v165 = vld [vmem:[#allocation5 + $0x1bc] sm:$0xf]
    %v166 = vld [vmem:[#allocation5 + $0x1c0] sm:$0xf]
    %v167 = vld [vmem:[#allocation5 + $0x1c4] sm:$0xf]
    %v168 = vld [vmem:[#allocation5 + $0x1c8] sm:$0xf]
    %v169 = vld [vmem:[#allocation5 + $0x1cc] sm:$0xf]
    %v170 = vld [vmem:[#allocation5 + $0x1d0] sm:$0xf]
    %v171 = vld [vmem:[#allocation5 + $0x1d4] sm:$0xf]
    %v172 = vld [vmem:[#allocation5 + $0x1d8] sm:$0xf]
    %v173 = vld [vmem:[#allocation5 + $0x1dc] sm:$0xf]
    %v174 = vld [vmem:[#allocation5 + $0x1e0] sm:$0xf]
    %v175 = vld [vmem:[#allocation5 + $0x1e4] sm:$0xf]
    %v176 = vld [vmem:[#allocation5 + $0x1e8] sm:$0xf]
    %v177 = vld [vmem:[#allocation5 + $0x1ec] sm:$0xf]
    %v178 = vld [vmem:[#allocation5 + $0x1f0] sm:$0xf]
    %v179 = vld [vmem:[#allocation5 + $0x1f4] sm:$0xf]
    %v180 = vld [vmem:[#allocation5 + $0x1f8] sm:$0xf]
    %v181 = vld [vmem:[#allocation5 + $0x1fc] sm:$0xf]
    %v182 = vld [vmem:[#allocation7] sm:$0xff]
    %v183 = vld [vmem:[#allocation2] sm:$0xff]
    %v184 = vld [vmem:[#allocation2 + $0x8] sm:$0xff]
    %v185 = vld [vmem:[#allocation2 + $0x10] sm:$0xff]
    %v186 = vld [vmem:[#allocation2 + $0x18] sm:$0xff]
    %v187 = vld [vmem:[#allocation2 + $0x20] sm:$0xff]
    %v188 = vld [vmem:[#allocation2 + $0x28] sm:$0xff]
    %v189 = vld [vmem:[#allocation2 + $0x30] sm:$0xff]
    %v190 = vld [vmem:[#allocation2 + $0x38] sm:$0xff]
    %v191 = vunpack.c.l.bf16 %v54
    %v192 = vunpack.c.l.bf16 %v55
    %v193 = vunpack.c.l.bf16 %v56
    %v194 = vunpack.c.l.bf16 %v57
    %v195 = vunpack.c.l.bf16 %v58
    %v196 = vunpack.c.l.bf16 %v59
    %v197 = vunpack.c.l.bf16 %v60
    %v198 = vunpack.c.l.bf16 %v61
    %v199 = vunpack.c.l.bf16 %v62
    %v200 = vunpack.c.l.bf16 %v63
    %v201 = vunpack.c.l.bf16 %v64
    %v202 = vunpack.c.l.bf16 %v65
    %v203 = vunpack.c.l.bf16 %v66
    %v204 = vunpack.c.l.bf16 %v67
    %v205 = vunpack.c.l.bf16 %v68
    %v206 = vunpack.c.l.bf16 %v69
    %v207 = vunpack.c.l.bf16 %v70
    %v208 = vunpack.c.l.bf16 %v71
    %v209 = vunpack.c.l.bf16 %v72
    %v210 = vunpack.c.l.bf16 %v73
    %v211 = vunpack.c.l.bf16 %v74
    %v212 = vunpack.c.l.bf16 %v75
    %v213 = vunpack.c.l.bf16 %v76
    %v214 = vunpack.c.l.bf16 %v77
    %v215 = vunpack.c.l.bf16 %v78
    %v216 = vunpack.c.l.bf16 %v79
    %v217 = vunpack.c.l.bf16 %v80
    %v218 = vunpack.c.l.bf16 %v81
    %v219 = vunpack.c.l.bf16 %v82
    %v220 = vunpack.c.l.bf16 %v83
    %v221 = vunpack.c.l.bf16 %v84
    %v222 = vunpack.c.l.bf16 %v85
    %v223 = vunpack.c.l.bf16 %v86
    %v224 = vunpack.c.l.bf16 %v87
    %v225 = vunpack.c.l.bf16 %v88
    %v226 = vunpack.c.l.bf16 %v89
    %v227 = vunpack.c.l.bf16 %v90
    %v228 = vunpack.c.l.bf16 %v91
    %v229 = vunpack.c.l.bf16 %v92
    %v230 = vunpack.c.l.bf16 %v93
    %v231 = vunpack.c.l.bf16 %v94
    %v232 = vunpack.c.l.bf16 %v95
    %v233 = vunpack.c.l.bf16 %v96
    %v234 = vunpack.c.l.bf16 %v97
    %v235 = vunpack.c.l.bf16 %v98
    %v236 = vunpack.c.l.bf16 %v99
    %v237 = vunpack.c.l.bf16 %v100
    %v238 = vunpack.c.l.bf16 %v101
    %v239 = vunpack.c.l.bf16 %v102
    %v240 = vunpack.c.l.bf16 %v103
    %v241 = vunpack.c.l.bf16 %v104
    %v242 = vunpack.c.l.bf16 %v105
    %v243 = vunpack.c.l.bf16 %v106
    %v244 = vunpack.c.l.bf16 %v107
    %v245 = vunpack.c.l.bf16 %v108
    %v246 = vunpack.c.l.bf16 %v109
    %v247 = vunpack.c.l.bf16 %v110
    %v248 = vunpack.c.l.bf16 %v111
    %v249 = vunpack.c.l.bf16 %v112
    %v250 = vunpack.c.l.bf16 %v113
    %v251 = vunpack.c.l.bf16 %v114
    %v252 = vunpack.c.l.bf16 %v115
    %v253 = vunpack.c.l.bf16 %v116
    %v254 = vunpack.c.l.bf16 %v117
    %v255 = vunpack.c.l.bf16 %v118
    %v256 = vunpack.c.l.bf16 %v119
    %v257 = vunpack.c.l.bf16 %v120
    %v258 = vunpack.c.l.bf16 %v121
    %v259 = vunpack.c.l.bf16 %v122
    %v260 = vunpack.c.l.bf16 %v123
    %v261 = vunpack.c.l.bf16 %v124
    %v262 = vunpack.c.l.bf16 %v125
    %v263 = vunpack.c.l.bf16 %v126
    %v264 = vunpack.c.l.bf16 %v127
    %v265 = vunpack.c.l.bf16 %v128
    %v266 = vunpack.c.l.bf16 %v129
    %v267 = vunpack.c.l.bf16 %v130
    %v268 = vunpack.c.l.bf16 %v131
    %v269 = vunpack.c.l.bf16 %v132
    %v270 = vunpack.c.l.bf16 %v133
    %v271 = vunpack.c.l.bf16 %v134
    %v272 = vunpack.c.l.bf16 %v135
    %v273 = vunpack.c.l.bf16 %v136
    %v274 = vunpack.c.l.bf16 %v137
    %v275 = vunpack.c.l.bf16 %v138
    %v276 = vunpack.c.l.bf16 %v139
    %v277 = vunpack.c.l.bf16 %v140
    %v278 = vunpack.c.l.bf16 %v141
    %v279 = vunpack.c.l.bf16 %v142
    %v280 = vunpack.c.l.bf16 %v143
    %v281 = vunpack.c.l.bf16 %v144
    %v282 = vunpack.c.l.bf16 %v145
    %v283 = vunpack.c.l.bf16 %v146
    %v284 = vunpack.c.l.bf16 %v147
    %v285 = vunpack.c.l.bf16 %v148
    %v286 = vunpack.c.l.bf16 %v149
    %v287 = vunpack.c.l.bf16 %v150
    %v288 = vunpack.c.l.bf16 %v151
    %v289 = vunpack.c.l.bf16 %v152
    %v290 = vunpack.c.l.bf16 %v153
    %v291 = vunpack.c.l.bf16 %v154
    %v292 = vunpack.c.l.bf16 %v155
    %v293 = vunpack.c.l.bf16 %v156
    %v294 = vunpack.c.l.bf16 %v157
    %v295 = vunpack.c.l.bf16 %v158
    %v296 = vunpack.c.l.bf16 %v159
    %v297 = vunpack.c.l.bf16 %v160
    %v298 = vunpack.c.l.bf16 %v161
    %v299 = vunpack.c.l.bf16 %v162
    %v300 = vunpack.c.l.bf16 %v163
    %v301 = vunpack.c.l.bf16 %v164
    %v302 = vunpack.c.l.bf16 %v165
    %v303 = vunpack.c.l.bf16 %v166
    %v304 = vunpack.c.l.bf16 %v167
    %v305 = vunpack.c.l.bf16 %v168
    %v306 = vunpack.c.l.bf16 %v169
    %v307 = vunpack.c.l.bf16 %v170
    %v308 = vunpack.c.l.bf16 %v171
    %v309 = vunpack.c.l.bf16 %v172
    %v310 = vunpack.c.l.bf16 %v173
    %v311 = vunpack.c.l.bf16 %v174
    %v312 = vunpack.c.l.bf16 %v175
    %v313 = vunpack.c.l.bf16 %v176
    %v314 = vunpack.c.l.bf16 %v177
    %v315 = vunpack.c.l.bf16 %v178
    %v316 = vunpack.c.l.bf16 %v179
    %v317 = vunpack.c.l.bf16 %v180
    %v318 = vunpack.c.l.bf16 %v181
    %v327 = vcombine.low %v183, %v185
    %v328 = vcombine.high %v183, %v185
    %v329 = vcombine.low %v187, %v189
    %v330 = vcombine.high %v187, %v189
    %v332 = vunpack.c.l.s4 1983009808
    %v333 = vunpack.c.0.s8 %v332
    %v334 = vlaneseq
    %v335 = vshrl.u32 %v334, 7
    %v336 = vsub.s32 %v333, %v335
    %v337 = vrot.slane %v327, %v336
    %v339 = vunpack.c.l.s4 1983009808
    %v340 = vunpack.c.0.s8 %v339
    %v341 = vlaneseq
    %v342 = vshrl.u32 %v341, 7
    %v343 = vsub.s32 %v340, %v342
    %v344 = vrot.slane %v328, %v343
    %v346 = vunpack.c.l.s4 1983009808
    %v347 = vunpack.c.0.s8 %v346
    %v348 = vlaneseq
    %v349 = vshrl.u32 %v348, 7
    %v350 = vsub.s32 %v347, %v349
    %v351 = vrot.slane %v329, %v350
    %v353 = vunpack.c.l.s4 1983009808
    %v354 = vunpack.c.0.s8 %v353
    %v355 = vlaneseq
    %v356 = vshrl.u32 %v355, 7
    %v357 = vsub.s32 %v354, %v356
    %v358 = vrot.slane %v330, %v357
    %v359 = vcombine.low %v337, %v351
    %v360 = vcombine.high %v337, %v351
    %v361 = vcombine.low %v344, %v358
    %v362 = vcombine.high %v344, %v358
    %v363 = vcombine.low %v184, %v186
    %v364 = vcombine.high %v184, %v186
    %v365 = vcombine.low %v188, %v190
    %v366 = vcombine.high %v188, %v190
    %v368 = vunpack.c.l.s4 1983009808
    %v369 = vunpack.c.0.s8 %v368
    %v370 = vlaneseq
    %v371 = vshrl.u32 %v370, 7
    %v372 = vsub.s32 %v369, %v371
    %v373 = vrot.slane %v363, %v372
    %v375 = vunpack.c.l.s4 1983009808
    %v376 = vunpack.c.0.s8 %v375
    %v377 = vlaneseq
    %v378 = vshrl.u32 %v377, 7
    %v379 = vsub.s32 %v376, %v378
    %v380 = vrot.slane %v364, %v379
    %v382 = vunpack.c.l.s4 1983009808
    %v383 = vunpack.c.0.s8 %v382
    %v384 = vlaneseq
    %v385 = vshrl.u32 %v384, 7
    %v386 = vsub.s32 %v383, %v385
    %v387 = vrot.slane %v365, %v386
    %v389 = vunpack.c.l.s4 1983009808
    %v390 = vunpack.c.0.s8 %v389
    %v391 = vlaneseq
    %v392 = vshrl.u32 %v391, 7
    %v393 = vsub.s32 %v390, %v392
    %v394 = vrot.slane %v366, %v393
    %v395 = vcombine.low %v373, %v387
    %v396 = vcombine.high %v373, %v387
    %v397 = vcombine.low %v380, %v394
    %v398 = vcombine.high %v380, %v394
    %407 = vmatprep.subr.mxu0 0.0
    %408 = vmatpush1.msra.mxu0 %v191
    %409 = vmatprep.subr.mxu0 0.0
    %410 = vmatpush1.msra.mxu0 %v192
    %411 = vmatprep.subr.mxu0 0.0
    %412 = vmatpush1.msra.mxu0 %v193
    %413 = vmatprep.subr.mxu0 0.0
    %414 = vmatpush1.msra.mxu0 %v194
    %415 = vmatprep.subr.mxu0 0.0
    %416 = vmatpush1.msra.mxu0 %v195
    %417 = vmatprep.subr.mxu0 0.0
    %418 = vmatpush1.msra.mxu0 %v196
    %419 = vmatprep.subr.mxu0 0.0
    %420 = vmatpush1.msra.mxu0 %v197
    %421 = vmatprep.subr.mxu0 0.0
    %422 = vmatpush1.msra.mxu0 %v198
    %423 = vmatprep.subr.mxu0 0.0
    %424 = vmatpush1.msra.mxu0 %v199
    %425 = vmatprep.subr.mxu0 0.0
    %426 = vmatpush1.msra.mxu0 %v200
    %427 = vmatprep.subr.mxu0 0.0
    %428 = vmatpush1.msra.mxu0 %v201
    %429 = vmatprep.subr.mxu0 0.0
    %430 = vmatpush1.msra.mxu0 %v202
    %431 = vmatprep.subr.mxu0 0.0
    %432 = vmatpush1.msra.mxu0 %v203
    %433 = vmatprep.subr.mxu0 0.0
    %434 = vmatpush1.msra.mxu0 %v204
    %435 = vmatprep.subr.mxu0 0.0
    %436 = vmatpush1.msra.mxu0 %v205
    %437 = vmatprep.subr.mxu0 0.0
    %438 = vmatpush1.msra.mxu0 %v206
    %439 = vmatprep.subr.mxu0 0.0
    %440 = vmatpush1.msra.mxu0 %v207
    %441 = vmatprep.subr.mxu0 0.0
    %442 = vmatpush1.msra.mxu0 %v208
    %443 = vmatprep.subr.mxu0 0.0
    %444 = vmatpush1.msra.mxu0 %v209
    %445 = vmatprep.subr.mxu0 0.0
    %446 = vmatpush1.msra.mxu0 %v210
    %447 = vmatprep.subr.mxu0 0.0
    %448 = vmatpush1.msra.mxu0 %v211
    %449 = vmatprep.subr.mxu0 0.0
    %450 = vmatpush1.msra.mxu0 %v212
    %451 = vmatprep.subr.mxu0 0.0
    %452 = vmatpush1.msra.mxu0 %v213
    %453 = vmatprep.subr.mxu0 0.0
    %454 = vmatpush1.msra.mxu0 %v214
    %455 = vmatprep.subr.mxu0 0.0
    %456 = vmatpush1.msra.mxu0 %v215
    %457 = vmatprep.subr.mxu0 0.0
    %458 = vmatpush1.msra.mxu0 %v216
    %459 = vmatprep.subr.mxu0 0.0
    %460 = vmatpush1.msra.mxu0 %v217
    %461 = vmatprep.subr.mxu0 0.0
    %462 = vmatpush1.msra.mxu0 %v218
    %463 = vmatprep.subr.mxu0 0.0
    %464 = vmatpush1.msra.mxu0 %v219
    %465 = vmatprep.subr.mxu0 0.0
    %466 = vmatpush1.msra.mxu0 %v220
    %467 = vmatprep.subr.mxu0 0.0
    %468 = vmatpush1.msra.mxu0 %v221
    %469 = vmatprep.subr.mxu0 0.0
    %470 = vmatpush1.msra.mxu0 %v222
    %471 = vmatprep.mubr.f32.mxu0 %v360
    %472 = vmatmul.mubr.f32.gmra.mrb[0].mxu0 %v359
    %v473 = vpop.f32.mrb[0].mxu0
    %v474 = vadd.f32 0.0, %v473
    %v475 = vpop.f32.mrb[0].mxu0
    %476 = vdwg.mxu0
    %477 = vmatprep.subr.mxu0 0.0
    %478 = vmatpush1.msra.mxu0 %v223
    %479 = vmatprep.subr.mxu0 0.0
    %480 = vmatpush1.msra.mxu0 %v224
    %481 = vmatprep.subr.mxu0 0.0
    %482 = vmatpush1.msra.mxu0 %v225
    %483 = vmatprep.subr.mxu0 0.0
    %484 = vmatpush1.msra.mxu0 %v226
    %485 = vmatprep.subr.mxu0 0.0
    %486 = vmatpush1.msra.mxu0 %v227
    %487 = vmatprep.subr.mxu0 0.0
    %488 = vmatpush1.msra.mxu0 %v228
    %489 = vmatprep.subr.mxu0 0.0
    %490 = vmatpush1.msra.mxu0 %v229
    %491 = vmatprep.subr.mxu0 0.0
    %492 = vmatpush1.msra.mxu0 %v230
    %493 = vmatprep.subr.mxu0 0.0
    %494 = vmatpush1.msra.mxu0 %v231
    %495 = vmatprep.subr.mxu0 0.0
    %496 = vmatpush1.msra.mxu0 %v232
    %497 = vmatprep.subr.mxu0 0.0
    %498 = vmatpush1.msra.mxu0 %v233
    %499 = vmatprep.subr.mxu0 0.0
    %500 = vmatpush1.msra.mxu0 %v234
    %501 = vmatprep.subr.mxu0 0.0
    %502 = vmatpush1.msra.mxu0 %v235
    %503 = vmatprep.subr.mxu0 0.0
    %504 = vmatpush1.msra.mxu0 %v236
    %505 = vmatprep.subr.mxu0 0.0
    %506 = vmatpush1.msra.mxu0 %v237
    %507 = vmatprep.subr.mxu0 0.0
    %508 = vmatpush1.msra.mxu0 %v238
    %509 = vmatprep.subr.mxu0 0.0
    %510 = vmatpush1.msra.mxu0 %v239
    %511 = vmatprep.subr.mxu0 0.0
    %512 = vmatpush1.msra.mxu0 %v240
    %513 = vmatprep.subr.mxu0 0.0
    %514 = vmatpush1.msra.mxu0 %v241
    %515 = vmatprep.subr.mxu0 0.0
    %516 = vmatpush1.msra.mxu0 %v242
    %517 = vmatprep.subr.mxu0 0.0
    %518 = vmatpush1.msra.mxu0 %v243
    %519 = vmatprep.subr.mxu0 0.0
    %520 = vmatpush1.msra.mxu0 %v244
    %521 = vmatprep.subr.mxu0 0.0
    %522 = vmatpush1.msra.mxu0 %v245
    %523 = vmatprep.subr.mxu0 0.0
    %524 = vmatpush1.msra.mxu0 %v246
    %525 = vmatprep.subr.mxu0 0.0
    %526 = vmatpush1.msra.mxu0 %v247
    %527 = vmatprep.subr.mxu0 0.0
    %528 = vmatpush1.msra.mxu0 %v248
    %529 = vmatprep.subr.mxu0 0.0
    %530 = vmatpush1.msra.mxu0 %v249
    %531 = vmatprep.subr.mxu0 0.0
    %532 = vmatpush1.msra.mxu0 %v250
    %533 = vmatprep.subr.mxu0 0.0
    %534 = vmatpush1.msra.mxu0 %v251
    %535 = vmatprep.subr.mxu0 0.0
    %536 = vmatpush1.msra.mxu0 %v252
    %537 = vmatprep.subr.mxu0 0.0
    %538 = vmatpush1.msra.mxu0 %v253
    %539 = vmatprep.subr.mxu0 0.0
    %540 = vmatpush1.msra.mxu0 %v254
    %541 = vmatprep.mubr.f32.mxu0 %v362
    %542 = vmatmul.mubr.f32.gmra.mrb[0].mxu0 %v361
    %v543 = vpop.f32.mrb[0].mxu0
    %v544 = vadd.f32 %v474, %v543
    %v545 = vpop.f32.mrb[0].mxu0
    %546 = vdwg.mxu0
    %547 = vmatprep.subr.mxu0 0.0
    %548 = vmatpush1.msra.mxu0 %v255
    %549 = vmatprep.subr.mxu0 0.0
    %550 = vmatpush1.msra.mxu0 %v256
    %551 = vmatprep.subr.mxu0 0.0
    %552 = vmatpush1.msra.mxu0 %v257
    %553 = vmatprep.subr.mxu0 0.0
    %554 = vmatpush1.msra.mxu0 %v258
    %555 = vmatprep.subr.mxu0 0.0
    %556 = vmatpush1.msra.mxu0 %v259
    %557 = vmatprep.subr.mxu0 0.0
    %558 = vmatpush1.msra.mxu0 %v260
    %559 = vmatprep.subr.mxu0 0.0
    %560 = vmatpush1.msra.mxu0 %v261
    %561 = vmatprep.subr.mxu0 0.0
    %562 = vmatpush1.msra.mxu0 %v262
    %563 = vmatprep.subr.mxu0 0.0
    %564 = vmatpush1.msra.mxu0 %v263
    %565 = vmatprep.subr.mxu0 0.0
    %566 = vmatpush1.msra.mxu0 %v264
    %567 = vmatprep.subr.mxu0 0.0
    %568 = vmatpush1.msra.mxu0 %v265
    %569 = vmatprep.subr.mxu0 0.0
    %570 = vmatpush1.msra.mxu0 %v266
    %571 = vmatprep.subr.mxu0 0.0
    %572 = vmatpush1.msra.mxu0 %v267
    %573 = vmatprep.subr.mxu0 0.0
    %574 = vmatpush1.msra.mxu0 %v268
    %575 = vmatprep.subr.mxu0 0.0
    %576 = vmatpush1.msra.mxu0 %v269
    %577 = vmatprep.subr.mxu0 0.0
    %578 = vmatpush1.msra.mxu0 %v270
    %579 = vmatprep.subr.mxu0 0.0
    %580 = vmatpush1.msra.mxu0 %v271
    %581 = vmatprep.subr.mxu0 0.0
    %582 = vmatpush1.msra.mxu0 %v272
    %583 = vmatprep.subr.mxu0 0.0
    %584 = vmatpush1.msra.mxu0 %v273
    %585 = vmatprep.subr.mxu0 0.0
    %586 = vmatpush1.msra.mxu0 %v274
    %587 = vmatprep.subr.mxu0 0.0
    %588 = vmatpush1.msra.mxu0 %v275
    %589 = vmatprep.subr.mxu0 0.0
    %590 = vmatpush1.msra.mxu0 %v276
    %591 = vmatprep.subr.mxu0 0.0
    %592 = vmatpush1.msra.mxu0 %v277
    %593 = vmatprep.subr.mxu0 0.0
    %594 = vmatpush1.msra.mxu0 %v278
    %595 = vmatprep.subr.mxu0 0.0
    %596 = vmatpush1.msra.mxu0 %v279
    %597 = vmatprep.subr.mxu0 0.0
    %598 = vmatpush1.msra.mxu0 %v280
    %599 = vmatprep.subr.mxu0 0.0
    %600 = vmatpush1.msra.mxu0 %v281
    %601 = vmatprep.subr.mxu0 0.0
    %602 = vmatpush1.msra.mxu0 %v282
    %603 = vmatprep.subr.mxu0 0.0
    %604 = vmatpush1.msra.mxu0 %v283
    %605 = vmatprep.subr.mxu0 0.0
    %606 = vmatpush1.msra.mxu0 %v284
    %607 = vmatprep.subr.mxu0 0.0
    %608 = vmatpush1.msra.mxu0 %v285
    %609 = vmatprep.subr.mxu0 0.0
    %610 = vmatpush1.msra.mxu0 %v286
    %611 = vmatprep.mubr.f32.mxu0 %v396
    %612 = vmatmul.mubr.f32.gmra.mrb[0].mxu0 %v395
    %v613 = vpop.f32.mrb[0].mxu0
    %v614 = vadd.f32 %v544, %v613
    %v615 = vpop.f32.mrb[0].mxu0
    %616 = vdwg.mxu0
    %617 = vmatprep.subr.mxu0 0.0
    %618 = vmatpush1.msra.mxu0 %v287
    %619 = vmatprep.subr.mxu0 0.0
    %620 = vmatpush1.msra.mxu0 %v288
    %621 = vmatprep.subr.mxu0 0.0
    %622 = vmatpush1.msra.mxu0 %v289
    %623 = vmatprep.subr.mxu0 0.0
    %624 = vmatpush1.msra.mxu0 %v290
    %625 = vmatprep.subr.mxu0 0.0
    %626 = vmatpush1.msra.mxu0 %v291
    %627 = vmatprep.subr.mxu0 0.0
    %628 = vmatpush1.msra.mxu0 %v292
    %629 = vmatprep.subr.mxu0 0.0
    %630 = vmatpush1.msra.mxu0 %v293
    %631 = vmatprep.subr.mxu0 0.0
    %632 = vmatpush1.msra.mxu0 %v294
    %633 = vmatprep.subr.mxu0 0.0
    %634 = vmatpush1.msra.mxu0 %v295
    %635 = vmatprep.subr.mxu0 0.0
    %636 = vmatpush1.msra.mxu0 %v296
    %637 = vmatprep.subr.mxu0 0.0
    %638 = vmatpush1.msra.mxu0 %v297
    %639 = vmatprep.subr.mxu0 0.0
    %640 = vmatpush1.msra.mxu0 %v298
    %641 = vmatprep.subr.mxu0 0.0
    %642 = vmatpush1.msra.mxu0 %v299
    %643 = vmatprep.subr.mxu0 0.0
    %644 = vmatpush1.msra.mxu0 %v300
    %645 = vmatprep.subr.mxu0 0.0
    %646 = vmatpush1.msra.mxu0 %v301
    %647 = vmatprep.subr.mxu0 0.0
    %648 = vmatpush1.msra.mxu0 %v302
    %649 = vmatprep.subr.mxu0 0.0
    %650 = vmatpush1.msra.mxu0 %v303
    %651 = vmatprep.subr.mxu0 0.0
    %652 = vmatpush1.msra.mxu0 %v304
    %653 = vmatprep.subr.mxu0 0.0
    %654 = vmatpush1.msra.mxu0 %v305
    %655 = vmatprep.subr.mxu0 0.0
    %656 = vmatpush1.msra.mxu0 %v306
    %657 = vmatprep.subr.mxu0 0.0
    %658 = vmatpush1.msra.mxu0 %v307
    %659 = vmatprep.subr.mxu0 0.0
    %660 = vmatpush1.msra.mxu0 %v308
    %661 = vmatprep.subr.mxu0 0.0
    %662 = vmatpush1.msra.mxu0 %v309
    %663 = vmatprep.subr.mxu0 0.0
    %664 = vmatpush1.msra.mxu0 %v310
    %665 = vmatprep.subr.mxu0 0.0
    %666 = vmatpush1.msra.mxu0 %v311
    %667 = vmatprep.subr.mxu0 0.0
    %668 = vmatpush1.msra.mxu0 %v312
    %669 = vmatprep.subr.mxu0 0.0
    %670 = vmatpush1.msra.mxu0 %v313
    %671 = vmatprep.subr.mxu0 0.0
    %672 = vmatpush1.msra.mxu0 %v314
    %673 = vmatprep.subr.mxu0 0.0
    %674 = vmatpush1.msra.mxu0 %v315
    %675 = vmatprep.subr.mxu0 0.0
    %676 = vmatpush1.msra.mxu0 %v316
    %677 = vmatprep.subr.mxu0 0.0
    %678 = vmatpush1.msra.mxu0 %v317
    %679 = vmatprep.subr.mxu0 0.0
    %680 = vmatpush1.msra.mxu0 %v318
    %681 = vmatprep.mubr.f32.mxu0 %v398
    %682 = vmatmul.mubr.f32.gmra.mrb[0].mxu0 %v397
    %v683 = vpop.f32.mrb[0].mxu0
    %v684 = vadd.f32 %v614, %v683
    %v685 = vpop.f32.mrb[0].mxu0
    %686 = vdwg.mxu0
    %v687 = vadd.f32 %v182, %v684
    %688 = vst [vmem:[#allocation7] sm:$0xff] %v687
    // Predicated region
    $region26: #{tpu_custom_call.1} parent=1 // pred_check
      _
    $region27: #{tpu_custom_call.1} parent=1 // pred_check_branch
      %690 = sbr.rel (0) target = $region29
    $region28: #{tpu_custom_call.1} parent=1 // pred_region
      %s692 = ssub.s32 128, 32
      %693 = vsyncadd [#allocation4], %s692
      %s694 = sshll.u32 [#allocation7], 4
      %s695 = int_to_ptr.vmem [resolvable:$true] %s694
      %700 = dma.vmem_to_hbm [thread:$0]  %s695, 32, %s3, [#allocation4], 32, 32, 2
    $region29: #{tpu_custom_call.1} parent=1 // pred_fallthru
      _
    // Predicated region
    $region30: #{tpu_custom_call.1} parent=1 // pred_check
      _
    $region31: #{tpu_custom_call.1} parent=1 // pred_check_branch
      %702 = sbr.rel (0) target = $region33
    $region32: #{tpu_custom_call.1} parent=1 // pred_region
      %703 = dma.done [#allocation4], 128
    $region33: #{tpu_custom_call.1} parent=1 // pred_fallthru
      _
    %704 = vsyncpa [#allocation3], 1
    %705 = vsyncpa [#allocation6], 1
    %706 = vsyncpa [#allocation4], 1

</llo_original>
